<compile_context>
chip_gen: v5e
topology: v5e:2x2
jax: 0.10.0
libtpu: 0.0.40
codegen_flags: <defaults>
</compile_context>

<pallas_src>
import jax
import jax.numpy as jnp
from jax.experimental import pallas as pl
from jax.experimental.pallas import tpu as pltpu


def _round_up(x: int, m: int) -> int:
    return ((x + m - 1) // m) * m


# --------------------------------------------------------------------------- #
# Kernel
# --------------------------------------------------------------------------- #
def _projection_head_kernel(x_ref, w1_ref, b1_ref, w2_ref, b2_ref, o_ref):
    # Hoist bias loads (one read per grid step, f32).
    b1 = b1_ref[...]          # (1, D_in)   f32
    b2 = b2_ref[...]          # (1, N_pad)  f32

    # Hidden layer: h = relu(x @ W1 + b1); bf16 operands, f32 MXU accumulation.
    h = jnp.dot(x_ref[...], w1_ref[...], preferred_element_type=jnp.float32)
    h = jnp.maximum(h + b1, 0.0)                      # bias + ReLU on the VPU

    # Output layer: y = h @ W2 + b2.  Downcast hidden acts to bf16 for the MXU.
    y = jnp.dot(h.astype(w2_ref.dtype), w2_ref[...],
                preferred_element_type=jnp.float32)
    o_ref[...] = (y + b2).astype(o_ref.dtype)


# --------------------------------------------------------------------------- #
# Parameter prep (run ONCE, not per forward call)
# --------------------------------------------------------------------------- #
def prepare_params(w1, b1, w2, b2, compute_dtype=jnp.bfloat16):
    """Pad the output-feature dim to a lane-dense multiple of 128 and cast the
    weight matrices to the MXU compute dtype.  Biases stay f32."""
    d_in, d_out = w2.shape
    n_pad = _round_up(d_out, 128)
    if n_pad != d_out:
        w2 = jnp.pad(w2, ((0, 0), (0, n_pad - d_out)))
        b2 = jnp.pad(b2, ((0, 0), (0, n_pad - d_out)))
    return {
        "w1": w1.astype(compute_dtype),               # (D_in, D_in)   bf16
        "b1": b1.astype(jnp.float32),                 # (1, D_in)      f32
        "w2": w2.astype(compute_dtype),               # (D_in, N_pad)  bf16
        "b2": b2.astype(jnp.float32),                 # (1, N_pad)     f32
        "d_in": d_in,
        "d_out": d_out,
        "n_pad": n_pad,
        "compute_dtype": compute_dtype,
    }


# --------------------------------------------------------------------------- #
# Batch-tile selection: bounded padding waste
# --------------------------------------------------------------------------- #
def _choose_tb(b8: int, block_b: int):
    """Return (TB, B_pad).  b8 is the batch already rounded up to 8."""
    block_b = max(8, (block_b // 8) * 8)
    if b8 <= block_b:
        return b8, b8                       # single grid step, no extra pad
    # Prefer an exact divisor of b8 (zero padding waste, good MXU fill).
    tb = min(block_b, b8)
    while tb >= 8:
        if b8 % tb == 0:
            if tb >= 256:
                return tb, b8
            break
        tb -= 8
    # Awkward batch: fixed 256-row tiles, waste bounded below one tile.
    tb = min(block_b, 256)
    return tb, _round_up(b8, tb)


def _vmem_budget_bytes(tb, d_in, n_pad, act_bytes, out_bytes):
    x_buf = 2 * tb * d_in * act_bytes            # double-buffered x tiles
    o_buf = 2 * tb * n_pad * out_bytes           # double-buffered out tiles
    w_buf = 2 * (d_in * d_in + d_in * n_pad) * act_bytes   # weights (worst case)
    b_buf = 2 * (d_in + n_pad) * 4
    hid = tb * d_in * 4                          # f32 hidden activations
    need = x_buf + o_buf + w_buf + b_buf + hid
    return int(min(max(2 * need + (4 << 20), 32 << 20), 128 << 20))


# --------------------------------------------------------------------------- #
# Forward wrapper
# --------------------------------------------------------------------------- #
def projection_head_forward(x, params, *, block_b: int = 512):
    """Pallas projection head: relu(x @ w1 + b1) @ w2 + b2.

    x: (B, D_in) float32.  params: output of prepare_params().
    Returns (B, D_out) float32.
    """
    B, d_in = x.shape
    assert d_in == params["d_in"]
    d_out, n_pad = params["d_out"], params["n_pad"]
    cdt = params["compute_dtype"]
    w1, b1, w2, b2 = params["w1"], params["b1"], params["w2"], params["b2"]

    # Cast activations to the MXU dtype (halves x HBM traffic).
    x = x.astype(cdt)

    # --- Batch tiling with bounded padding waste ---------------------------
    b8 = _round_up(B, 8)
    TB, B_pad = _choose_tb(b8, block_b)
    if B_pad != B:
        x = jnp.pad(x, ((0, B_pad - B), (0, 0)))
    grid = (B_pad // TB,)

    act_bytes = jnp.dtype(cdt).itemsize
    out_dtype = jnp.float32
    out_bytes = jnp.dtype(out_dtype).itemsize

    cost = pl.CostEstimate(
        flops=2 * B_pad * d_in * (d_in + n_pad),
        transcendentals=0,
        bytes_accessed=(B_pad * d_in * act_bytes
                        + (d_in * d_in + d_in * n_pad) * act_bytes
                        + (d_in + n_pad) * 4
                        + B_pad * n_pad * out_bytes),
    )

    out = pl.pallas_call(
        _projection_head_kernel,
        out_shape=jax.ShapeDtypeStruct((B_pad, n_pad), out_dtype),
        grid=grid,
        in_specs=[
            # Activations: tiled over batch (double-buffered by the pipeline).
            pl.BlockSpec((TB, d_in), lambda i: (i, 0)),
            # Weights / biases: constant block index -> fetched once, then
            # VMEM-resident across all grid steps (no re-DMA).
            pl.BlockSpec((d_in, d_in), lambda i: (0, 0)),
            pl.BlockSpec((1, d_in), lambda i: (0, 0)),
            pl.BlockSpec((d_in, n_pad), lambda i: (0, 0)),
            pl.BlockSpec((1, n_pad), lambda i: (0, 0)),
        ],
        out_specs=pl.BlockSpec((TB, n_pad), lambda i: (i, 0)),
        compiler_params=pltpu.CompilerParams(
            # Batch axis is embarrassingly parallel -> both TCs on v7x.
            dimension_semantics=("parallel",),
            vmem_limit_bytes=_vmem_budget_bytes(TB, d_in, n_pad,
                                                act_bytes, out_bytes),
        ),
        cost_estimate=cost,
    )(x, w1, b1, w2, b2)

    # Strip batch / lane padding.
    return out[:B, :d_out]


def _reference(x, w1, b1, w2, b2):
    h = jnp.maximum(x @ w1 + b1, 0.0)
    return h @ w2 + b2


if __name__ == "__main__":
    # Small shapes consistent with the module: batch=8, input_dim=32, output_dim=16.
    B, D_IN, D_OUT = 8, 32, 16

    key = jax.random.PRNGKey(0)
    kx, kw1, kb1, kw2, kb2 = jax.random.split(key, 5)

    x = jax.random.normal(kx, (B, D_IN), dtype=jnp.float32)

    # Deterministic parameter init (synthetic; mimics nn.Linear uniform scale).
    lim1 = 1.0 / jnp.sqrt(jnp.float32(D_IN))
    w1 = jax.random.uniform(kw1, (D_IN, D_IN), jnp.float32, -lim1, lim1)
    b1 = jax.random.uniform(kb1, (1, D_IN), jnp.float32, -lim1, lim1)
    w2 = jax.random.uniform(kw2, (D_IN, D_OUT), jnp.float32, -lim1, lim1)
    b2 = jax.random.uniform(kb2, (1, D_OUT), jnp.float32, -lim1, lim1)

    # Prepare (pad + bf16-cast) weights once, outside the forward pass.
    params = prepare_params(w1, b1, w2, b2)

    out = projection_head_forward(x, params)
    out = jax.block_until_ready(out)

    ref = _reference(x, w1, b1, w2, b2)
    assert out.shape == (B, D_OUT)
    # bf16 operands with f32 accumulation: tolerance relaxed vs pure-f32.
    assert jnp.allclose(out, ref, atol=5e-2, rtol=5e-2), "mismatch vs reference"

    print("KERNEL_OK")
</pallas_src>

<mosaic_0001>
module attributes {stable_mosaic.version = 11 : i64} {
  func.func @_projection_head_kernel(%arg0: i32, %arg1: memref<8x32xbf16, #tpu.memory_space<vmem>>, %arg2: memref<32x32xbf16, #tpu.memory_space<vmem>>, %arg3: memref<1x32xf32, #tpu.memory_space<vmem>>, %arg4: memref<32x128xbf16, #tpu.memory_space<vmem>>, %arg5: memref<1x128xf32, #tpu.memory_space<vmem>>, %arg6: memref<8x128xf32, #tpu.memory_space<vmem>>) attributes {dimension_semantics = [#tpu.dimension_semantics<parallel>], iteration_bounds = array<i64: 1>, scalar_prefetch = 0 : i64, scratch_operands = 0 : i64, tpu.core_type = #tpu.core_type<tc>, window_params = [{transform_indices = @transform_0, window_bounds = array<i64: 8, 32>}, {pipeline_mode = #tpu.pipeline_mode<synchronous>, transform_indices = @transform_1, window_bounds = array<i64: 32, 32>}, {pipeline_mode = #tpu.pipeline_mode<synchronous>, transform_indices = @transform_2, window_bounds = array<i64: 1, 32>}, {pipeline_mode = #tpu.pipeline_mode<synchronous>, transform_indices = @transform_3, window_bounds = array<i64: 32, 128>}, {pipeline_mode = #tpu.pipeline_mode<synchronous>, transform_indices = @transform_4, window_bounds = array<i64: 1, 128>}, {transform_indices = @transform_5, window_bounds = array<i64: 8, 128>}]} {
    %c0 = arith.constant 0 : index
    %c0_0 = arith.constant 0 : index
    %0 = vector.load %arg3[%c0, %c0_0] : memref<1x32xf32, #tpu.memory_space<vmem>>, vector<1x32xf32>
    %c0_1 = arith.constant 0 : index
    %c0_2 = arith.constant 0 : index
    %1 = vector.load %arg5[%c0_1, %c0_2] : memref<1x128xf32, #tpu.memory_space<vmem>>, vector<1x128xf32>
    %c0_3 = arith.constant 0 : index
    %c0_4 = arith.constant 0 : index
    %2 = vector.load %arg1[%c0_3, %c0_4] : memref<8x32xbf16, #tpu.memory_space<vmem>>, vector<8x32xbf16>
    %c0_5 = arith.constant 0 : index
    %c0_6 = arith.constant 0 : index
    %3 = vector.load %arg2[%c0_5, %c0_6] : memref<32x32xbf16, #tpu.memory_space<vmem>>, vector<32x32xbf16>
    %cst = arith.constant dense<0.000000e+00> : vector<8x32xf32>
    %4 = tpu.matmul %2, %3, %cst {dimension_numbers = #tpu.dot_dimension_numbers<[1], [0], [0], [1], [0, 0, 1, 1], [], []>} : vector<8x32xbf16>, vector<32x32xbf16>, vector<8x32xf32> -> vector<8x32xf32>
    %5 = vector.broadcast %0 : vector<1x32xf32> to vector<8x32xf32>
    %6 = arith.addf %4, %5 : vector<8x32xf32>
    %cst_7 = arith.constant 0.000000e+00 : f32
    %7 = vector.broadcast %cst_7 : f32 to vector<8x32xf32>
    %8 = arith.maximumf %6, %7 : vector<8x32xf32>
    %9 = arith.truncf %8 : vector<8x32xf32> to vector<8x32xbf16>
    %c0_8 = arith.constant 0 : index
    %c0_9 = arith.constant 0 : index
    %10 = vector.load %arg4[%c0_8, %c0_9] : memref<32x128xbf16, #tpu.memory_space<vmem>>, vector<32x128xbf16>
    %cst_10 = arith.constant dense<0.000000e+00> : vector<8x128xf32>
    %11 = tpu.matmul %9, %10, %cst_10 {dimension_numbers = #tpu.dot_dimension_numbers<[1], [0], [0], [1], [0, 0, 1, 1], [], []>} : vector<8x32xbf16>, vector<32x128xbf16>, vector<8x128xf32> -> vector<8x128xf32>
    %12 = vector.broadcast %1 : vector<1x128xf32> to vector<8x128xf32>
    %13 = arith.addf %11, %12 : vector<8x128xf32>
    %c0_11 = arith.constant 0 : index
    %c0_12 = arith.constant 0 : index
    %14 = vector.load %arg6[%c0_11, %c0_12] : memref<8x128xf32, #tpu.memory_space<vmem>>, vector<8x128xf32>
    tpu.vector_store %arg6[%c0_11, %c0_12], %13 {strides = array<i32>} : memref<8x128xf32, #tpu.memory_space<vmem>>, vector<8x128xf32>,
    return
  }
  func.func @transform_0(%arg0: i32) -> (i32, i32) {
    %c0_i32 = arith.constant 0 : i32
    %c0_i32_0 = arith.constant 0 : i32
    return %arg0, %c0_i32 : i32, i32
  }
  func.func @transform_1(%arg0: i32) -> (i32, i32) {
    %c0_i32 = arith.constant 0 : i32
    %c0_i32_0 = arith.constant 0 : i32
    %c0_i32_1 = arith.constant 0 : i32
    return %c0_i32, %c0_i32_0 : i32, i32
  }
  func.func @transform_2(%arg0: i32) -> (i32, i32) {
    %c0_i32 = arith.constant 0 : i32
    %c0_i32_0 = arith.constant 0 : i32
    %c0_i32_1 = arith.constant 0 : i32
    return %c0_i32, %c0_i32_0 : i32, i32
  }
  func.func @transform_3(%arg0: i32) -> (i32, i32) {
    %c0_i32 = arith.constant 0 : i32
    %c0_i32_0 = arith.constant 0 : i32
    %c0_i32_1 = arith.constant 0 : i32
    return %c0_i32, %c0_i32_0 : i32, i32
  }
  func.func @transform_4(%arg0: i32) -> (i32, i32) {
    %c0_i32 = arith.constant 0 : i32
    %c0_i32_0 = arith.constant 0 : i32
    %c0_i32_1 = arith.constant 0 : i32
    return %c0_i32, %c0_i32_0 : i32, i32
  }
  func.func @transform_5(%arg0: i32) -> (i32, i32) {
    %c0_i32 = arith.constant 0 : i32
    %c0_i32_0 = arith.constant 0 : i32
    return %arg0, %c0_i32 : i32, i32
  }
}

</mosaic_0001>

<llo_original>
// kernel: tpu_custom_call.1
$region0: #{tpu_custom_call.1}
  #allocation0 [shape = 'u32[]', space=smem, size = 0x4, offset = 0x4, fixed_abs, tag = 'smem constant byte address 0x4 - core index']
  #allocation1 [shape = 'u32[72,128]{1,0:T(1,128)}', space=vmem, size = 0x9000, scoped, tag = 'internal scratch']
  %s0 = inlined_call_operand.hbm [shape: bf16[8,32], index: 0, kind: input, shape index: {}]
  %s1 = inlined_call_operand.hbm [shape: bf16[32,32], index: 1, kind: input, shape index: {}]
  %s2 = inlined_call_operand.vmem [shape: f32[1,32], index: 2, kind: input, shape index: {}]
  %s3 = inlined_call_operand.hbm [shape: bf16[32,128], index: 3, kind: input, shape index: {}]
  %s4 = inlined_call_operand.vmem [shape: f32[1,128], index: 4, kind: input, shape index: {}]
  %s5 = inlined_call_operand.hbm [shape: f32[8,128], index: 5, kind: output, shape index: {}]
  %s6 = sld [smem:[#allocation0]]
  $region42: #{tpu_custom_call.1} parent=0
    _
  %s8 = ssub.s32 1, %s6
  %s9 = scalar_select 0, %s8, %s6
  $region1: #{tpu_custom_call.1} parent=0
    #allocation2 [shape = 'u8[2048]{0}', space=vmem, size = 0x800, scoped, tag = 'input window, operand 0, single buffered']
    #allocation3 [shape = 's32[1]{0}', space=sflag, size = 0x4, scoped, tag = 'scoped memory for tpu_custom_call.1']
    #allocation4 [shape = 's32[1]{0}', space=sflag, size = 0x4, scoped, tag = 'scoped memory for tpu_custom_call.1']
    #allocation5 [shape = 'u8[8192]{0}', space=vmem, size = 0x2000, scoped, tag = 'input window, operand 1, single buffered']
    #allocation6 [shape = 's32[1]{0}', space=sflag, size = 0x4, scoped, tag = 'scoped memory for tpu_custom_call.1']
    #allocation7 [shape = 'u8[8192]{0}', space=vmem, size = 0x2000, scoped, tag = 'input window, operand 3, single buffered']
    #allocation8 [shape = 'u8[4096]{0}', space=vmem, size = 0x1000, scoped, tag = 'output window, operand 0, single buffered']
    %10 = vsyncpa [#allocation3], 0
    %11 = vsyncpa [#allocation6], 0
    %12 = vsyncpa [#allocation4], 0
    // Predicated region
    $region2: #{tpu_custom_call.1} parent=1 // pred_check
      _
    $region3: #{tpu_custom_call.1} parent=1 // pred_check_branch
      %14 = sbr.rel (0) target = $region5
    $region4: #{tpu_custom_call.1} parent=1 // pred_region
      %16 = vsyncadd [#allocation3], 0
      %s18 = sshll.u32 %s0, 4
      %s19 = int_to_ptr.hbm [resolvable:$true] %s18
      %s20 = sshll.u32 [#allocation2], 4
      %s21 = int_to_ptr.vmem [resolvable:$true] %s20
      %23 = dma.hbm_to_vmem [thread:$0]  %s19, 64, %s21, [#allocation3]
    $region5: #{tpu_custom_call.1} parent=1 // pred_fallthru
      _
    // Predicated region
    $region6: #{tpu_custom_call.1} parent=1 // pred_check
      _
    $region7: #{tpu_custom_call.1} parent=1 // pred_check_branch
      %25 = sbr.rel (0) target = $region9
    $region8: #{tpu_custom_call.1} parent=1 // pred_region
      %27 = vsyncadd [#allocation6], 0
      %s28 = sshll.u32 %s1, 4
      %s29 = int_to_ptr.hbm [resolvable:$true] %s28
      %s30 = sshll.u32 [#allocation5], 4
      %s31 = int_to_ptr.vmem [resolvable:$true] %s30
      %36 = dma.hbm_to_vmem [thread:$0]  %s29, 256, %s31, [#allocation6], 64, 64, 4
    $region9: #{tpu_custom_call.1} parent=1 // pred_fallthru
      _
    // Predicated region
    $region10: #{tpu_custom_call.1} parent=1 // pred_check
      _
    $region11: #{tpu_custom_call.1} parent=1 // pred_check_branch
      %38 = sbr.rel (0) target = $region13
    $region12: #{tpu_custom_call.1} parent=1 // pred_region
      _
    $region13: #{tpu_custom_call.1} parent=1 // pred_fallthru
      _
    // Predicated region
    $region14: #{tpu_custom_call.1} parent=1 // pred_check
      _
    $region15: #{tpu_custom_call.1} parent=1 // pred_check_branch
      %40 = sbr.rel (0) target = $region17
    $region16: #{tpu_custom_call.1} parent=1 // pred_region
      %42 = vsyncadd [#allocation6], 0
      %s43 = sshll.u32 %s3, 4
      %s44 = int_to_ptr.hbm [resolvable:$true] %s43
      %s45 = sshll.u32 [#allocation7], 4
      %s46 = int_to_ptr.vmem [resolvable:$true] %s45
      %51 = dma.hbm_to_vmem [thread:$0]  %s44, 256, %s46, [#allocation6], 64, 64, 4
    $region17: #{tpu_custom_call.1} parent=1 // pred_fallthru
      _
    // Predicated region
    $region18: #{tpu_custom_call.1} parent=1 // pred_check
      _
    $region19: #{tpu_custom_call.1} parent=1 // pred_check_branch
      %53 = sbr.rel (0) target = $region21
    $region20: #{tpu_custom_call.1} parent=1 // pred_region
      _
    $region21: #{tpu_custom_call.1} parent=1 // pred_fallthru
      _
    // Predicated region
    $region22: #{tpu_custom_call.1} parent=1 // pred_check
      _
    $region23: #{tpu_custom_call.1} parent=1 // pred_check_branch
      %55 = sbr.rel (0) target = $region25
    $region24: #{tpu_custom_call.1} parent=1 // pred_region
      %57 = dma.done [#allocation3], 64
    $region25: #{tpu_custom_call.1} parent=1 // pred_fallthru
      _
    // Predicated region
    $region26: #{tpu_custom_call.1} parent=1 // pred_check
      _
    $region27: #{tpu_custom_call.1} parent=1 // pred_check_branch
      %59 = sbr.rel (0) target = $region29
    $region28: #{tpu_custom_call.1} parent=1 // pred_region
      %61 = dma.done [#allocation6], 256
    $region29: #{tpu_custom_call.1} parent=1 // pred_fallthru
      _
    // Predicated region
    $region30: #{tpu_custom_call.1} parent=1 // pred_check
      _
    $region31: #{tpu_custom_call.1} parent=1 // pred_check_branch
      %63 = sbr.rel (0) target = $region33
    $region32: #{tpu_custom_call.1} parent=1 // pred_region
      %65 = dma.done [#allocation6], 256
    $region33: #{tpu_custom_call.1} parent=1 // pred_fallthru
      _
    %v67 = vld [vmem:[%s2] sm:$0x1]
    %v68 = vld [vmem:[%s4] sm:$0x1]
    %v69 = vld [vmem:[#allocation2] sm:$0xf]
    %v70 = vld [vmem:[#allocation5] sm:$0xf]
    %v71 = vld [vmem:[#allocation5 + $0x4] sm:$0xf]
    %v72 = vld [vmem:[#allocation5 + $0x8] sm:$0xf]
    %v73 = vld [vmem:[#allocation5 + $0xc] sm:$0xf]
    %v75 = vperm.slane %v67, 0
    %v81 = vunpack.c.l.b16 %v70
    %v82 = vunpack.c.l.b16 %v71
    %v83 = vunpack.c.l.b16 %v72
    %v84 = vunpack.c.l.b16 %v73
    %v85 = vpack.c.b16 %v82, %v81
    %v86 = vpack.c.b16 %v84, %v83
    %vm89 = vcmask 261120
    %v91 = vsel %vm89, %v69, 0
    %93 = vmatpush.bf16.msra.mxu0 0
    %94 = vmatpush.bf16.msra.mxu0 0
    %95 = vmatpush.bf16.msra.mxu0 0
    %96 = vmatpush.bf16.msra.mxu0 0
    %97 = vmatpush.bf16.msra.mxu0 0
    %98 = vmatpush.bf16.msra.mxu0 0
    %99 = vmatpush.bf16.msra.mxu0 %v86
    %100 = vmatpush.bf16.msra.mxu0 %v85
    %101 = vmatmul.bf16.gmra.mxu0 %v91
    %v102 = vpop.f32.mrf.mxu0
    %v103 = vadd.f32 %v75, %v102
    %v104 = vpop.f32.mrf.mxu0
    %105 = vdwg.mxu0
    %v106 = vmax.f32 %v103, 0.0
    %v107 = vpack.c.bf16 %v106, %v106
    %v108 = vld [vmem:[#allocation7] sm:$0xf]
    %v109 = vld [vmem:[#allocation7 + $0x4] sm:$0xf]
    %v110 = vld [vmem:[#allocation7 + $0x8] sm:$0xf]
    %v111 = vld [vmem:[#allocation7 + $0xc] sm:$0xf]
    %v113 = vperm.slane %v68, 0
    %v119 = vunpack.c.l.b16 %v108
    %v120 = vunpack.c.l.b16 %v109
    %v121 = vunpack.c.l.b16 %v110
    %v122 = vunpack.c.l.b16 %v111
    %v123 = vpack.c.b16 %v120, %v119
    %v124 = vpack.c.b16 %v122, %v121
    %v128 = vsel %vm89, %v107, 0
    %130 = vmatpush.bf16.msra.mxu0 0
    %131 = vmatpush.bf16.msra.mxu0 0
    %132 = vmatpush.bf16.msra.mxu0 0
    %133 = vmatpush.bf16.msra.mxu0 0
    %134 = vmatpush.bf16.msra.mxu0 0
    %135 = vmatpush.bf16.msra.mxu0 0
    %136 = vmatpush.bf16.msra.mxu0 %v124
    %137 = vmatpush.bf16.msra.mxu0 %v123
    %138 = vmatmul.bf16.gmra.mxu0 %v128
    %v139 = vpop.f32.mrf.mxu0
    %v140 = vadd.f32 %v113, %v139
    %v141 = vpop.f32.mrf.mxu0
    %142 = vdwg.mxu0
    %143 = vst [vmem:[#allocation8] sm:$0xff] %v140
    // Predicated region
    $region34: #{tpu_custom_call.1} parent=1 // pred_check
      _
    $region35: #{tpu_custom_call.1} parent=1 // pred_check_branch
      %145 = sbr.rel (0) target = $region37
    $region36: #{tpu_custom_call.1} parent=1 // pred_region
      %147 = vsyncadd [#allocation4], 0
      %s149 = sshll.u32 [#allocation8], 4
      %s150 = int_to_ptr.vmem [resolvable:$true] %s149
      %s151 = sshll.u32 %s5, 4
      %s152 = int_to_ptr.hbm [resolvable:$true] %s151
      %154 = dma.vmem_to_hbm [thread:$0]  %s150, 128, %s152, [#allocation4]
    $region37: #{tpu_custom_call.1} parent=1 // pred_fallthru
      _
    // Predicated region
    $region38: #{tpu_custom_call.1} parent=1 // pred_check
      _
    $region39: #{tpu_custom_call.1} parent=1 // pred_check_branch
      %156 = sbr.rel (0) target = $region41
    $region40: #{tpu_custom_call.1} parent=1 // pred_region
      %158 = dma.done [#allocation4], 128
    $region41: #{tpu_custom_call.1} parent=1 // pred_fallthru
      _
    %159 = vsyncpa [#allocation3], 1
    %160 = vsyncpa [#allocation6], 1
    %161 = vsyncpa [#allocation4], 1

</llo_original>
